<compile_context>
chip_gen: v5e
topology: v5e:2x2
jax: 0.10.0
libtpu: 0.0.40
codegen_flags: <defaults>
</compile_context>

<pallas_src>
import jax
import jax.numpy as jnp
from jax.experimental import pallas as pl
from jax.experimental.pallas import tpu as pltpu

_LANES = 128
_SUBLANES = 8


def _round_up(n, m):
    return ((n + m - 1) // m) * m


def _round_down(n, m):
    return (n // m) * m


def _largest_aligned_divisor(n, unit, cap):
    """Largest multiple of `unit` that divides n and is <= cap, else None."""
    top = _round_down(min(cap, n), unit)
    for t in range(top, 0, -unit):
        if n % t == 0:
            return t
    return None


def _vmem_budget():
    """Per-generation input-tile budget and scoped-VMEM limit."""
    vmem_phys = 128 * 1024 * 1024
    try:
        vmem_phys = int(pltpu.get_tpu_info().vmem_capacity_bytes)
    except Exception:
        pass  # off-TPU / interpret: fall back to the conservative default
    # ~1/8 of physical VMEM per input tile (x2 for double buffering) leaves
    # ample headroom for scratch/output buffers on every generation:
    # v5e/v6e (128 MiB) -> 16 MiB tiles, v7x (64 MiB) -> 8 MiB tiles.
    tile_budget = max(2 * 1024 * 1024, min(16 * 1024 * 1024, vmem_phys // 8))
    vmem_limit = min(64 * 1024 * 1024, (vmem_phys // 4) * 3)
    return tile_budget, vmem_limit


def _single_step_kernel(inv_n):
    """n_k == 1: the whole row is resident -> direct reduce, no scratch."""
    def kernel(x_ref, o_ref):
        s = jnp.sum(x_ref[...].astype(jnp.float32), axis=-1, keepdims=True)
        o_ref[...] = (s * inv_n).astype(o_ref.dtype)
    return kernel


def _multi_step_kernel(tile_r, tile_k, inv_n):
    """Reduction axis tiled: accumulate 128-lane chunks into a VMEM scratch."""
    n_chunks = tile_k // _LANES  # tile_k is 128-aligned on this path

    def kernel(x_ref, o_ref, acc_ref):
        k = pl.program_id(1)

        @pl.when(k == 0)
        def _init():
            acc_ref[...] = jnp.zeros_like(acc_ref)

        # Accumulate each 128-lane chunk straight into the VMEM accumulator:
        # bounded vreg live ranges (no tile-wide temporary), pure VPU adds.
        def body(j, carry):
            off = pl.multiple_of(j * _LANES, _LANES)
            acc_ref[...] += x_ref[:, pl.ds(off, _LANES)].astype(jnp.float32)
            return carry

        jax.lax.fori_loop(0, n_chunks, body, 0, unroll=min(n_chunks, 8))

        @pl.when(k == pl.num_programs(1) - 1)
        def _finalize():
            # One cross-lane (XLU) reduce + a single 1/(H*W) scale per tile.
            s = jnp.sum(acc_ref[...], axis=-1, keepdims=True) * inv_n
            o_ref[...] = s.astype(o_ref.dtype)

    return kernel


def spatial_avg_pool(x, in_channels, *, tile_budget_bytes=None):
    """Global spatial average pool: (B, C, H, W) -> (B, in_channels, 1, 1)."""
    B, C, H, W = x.shape
    assert C == in_channels
    R = B * C
    K = H * W
    inv_n = 1.0 / float(K)  # plain Python float -> immediate constant in kernel
    itemsize = jnp.dtype(x.dtype).itemsize

    tile_budget, vmem_limit = _vmem_budget()
    if tile_budget_bytes is not None:  # test hook: force the tiled-K path
        tile_budget = tile_budget_bytes

    # Row-major view: row b*C + c <-> (b, c); columns = flattened H*W.
    x2 = x.reshape(R, K)

    # --- reduction-axis (K) tiling ------------------------------------------
    # Prefer a whole row per tile (n_k == 1): longest contiguous DMA segments,
    # no scratch and no init/finalize. Only enormous H*W falls back to tiling.
    k_cols = K
    if _SUBLANES * _round_up(K, _LANES) * itemsize <= tile_budget:
        tile_k = K
    else:
        cap_k = max(_LANES, tile_budget // (_SUBLANES * itemsize))
        tile_k = _largest_aligned_divisor(K, _LANES, cap_k)
        if tile_k is None:
            # No lane-aligned divisor: zero-pad K so a wide aligned tile
            # exists (zeros don't change the sum; we still scale by 1/(H*W)).
            tile_k = min(_round_down(cap_k, _LANES), 8192)
            k_cols = _round_up(K, tile_k)
            x2 = jnp.pad(x2, ((0, 0), (0, k_cols - K)))
    n_k = k_cols // tile_k

    # --- row-axis (B*C) tiling ------------------------------------------------
    # VMEM footprint counts lane padding (each row is padded to 128 lanes).
    vmem_cols = _round_up(tile_k, _LANES)
    row_cap = max(_SUBLANES,
                  _round_down(tile_budget // (vmem_cols * itemsize), _SUBLANES))
    # Keep >= 2 row tiles so the "parallel" axis can be sharded across both
    # v7x TensorCores (one extra, fully hidden grid step on 1-TC chips).
    if R >= 2 * _SUBLANES:
        row_cap = min(row_cap, max(_SUBLANES, _round_down(R // 2, _SUBLANES)))
    tile_r = _largest_aligned_divisor(R, _SUBLANES, row_cap)
    n_rows = R
    if tile_r is None:
        if R <= row_cap:
            tile_r = R                       # full extent: legal & fits budget
        else:
            tile_r = row_cap                 # pad rows up to a tile multiple
            n_rows = _round_up(R, tile_r)
            x2 = jnp.pad(x2, ((0, n_rows - R), (0, 0)))
    n_r = n_rows // tile_r

    cost = pl.CostEstimate(
        flops=n_rows * k_cols,               # one add per input element
        transcendentals=0,
        bytes_accessed=n_rows * k_cols * itemsize + n_rows * itemsize,
    )
    out_shape = jax.ShapeDtypeStruct((n_rows, 1), x.dtype)

    if n_k == 1:
        pooled = pl.pallas_call(
            _single_step_kernel(inv_n),
            out_shape=out_shape,
            grid_spec=pltpu.PrefetchScalarGridSpec(
                num_scalar_prefetch=0,
                grid=(n_r,),
                in_specs=[pl.BlockSpec((tile_r, tile_k), lambda r: (r, 0))],
                out_specs=pl.BlockSpec((tile_r, 1), lambda r: (r, 0)),
            ),
            compiler_params=pltpu.CompilerParams(
                dimension_semantics=("parallel",),
                vmem_limit_bytes=vmem_limit,
            ),
            cost_estimate=cost,
        )(x2)
    else:
        pooled = pl.pallas_call(
            _multi_step_kernel(tile_r, tile_k, inv_n),
            out_shape=out_shape,
            grid_spec=pltpu.PrefetchScalarGridSpec(
                num_scalar_prefetch=0,
                grid=(n_r, n_k),             # reduction axis last
                in_specs=[pl.BlockSpec((tile_r, tile_k), lambda r, k: (r, k))],
                out_specs=pl.BlockSpec((tile_r, 1), lambda r, k: (r, 0)),
                scratch_shapes=[pltpu.VMEM((tile_r, _LANES), jnp.float32)],
            ),
            compiler_params=pltpu.CompilerParams(
                dimension_semantics=("parallel", "arbitrary"),
                vmem_limit_bytes=vmem_limit,
            ),
            cost_estimate=cost,
        )(x2)

    if n_rows != R:
        pooled = pooled[:R]
    return pooled.reshape(B, in_channels, 1, 1)


def _check(x, **kwargs):
    B, C, H, W = x.shape
    out = jax.block_until_ready(spatial_avg_pool(x, in_channels=C, **kwargs))
    ref = jnp.mean(jnp.mean(x, axis=-1), axis=-1).reshape(B, C, 1, 1)
    assert out.shape == (B, C, 1, 1), out.shape
    assert jnp.allclose(out, ref, atol=1e-5, rtol=1e-5), (
        f"mismatch for shape {x.shape}: max err "
        f"{jnp.max(jnp.abs(out - ref))}")


if __name__ == "__main__":
    key = jax.random.PRNGKey(0)
    k1, k2, k3, k4 = jax.random.split(key, 4)

    # Primary small test shape (matches the example sizing guidance).
    _check(jax.random.normal(k1, (2, 4, 16, 16), dtype=jnp.float32))
    # attnNet production-style shape: 7x7 spatial (K=49), multiple row tiles.
    _check(jax.random.normal(k2, (2, 256, 7, 7), dtype=jnp.float32))
    # Force the tiled ("arbitrary") reduction path via a tiny tile budget.
    _check(jax.random.normal(k3, (2, 8, 64, 64), dtype=jnp.float32),
           tile_budget_bytes=64 * 1024)
    # Odd B*C (not a multiple of 8): full-extent row-tile fallback.
    _check(jax.random.normal(k4, (1, 3, 16, 16), dtype=jnp.float32))

    print("KERNEL_OK")
</pallas_src>

<mosaic_0001>
module attributes {stable_mosaic.version = 11 : i64} {
  func.func @kernel(%arg0: i32, %arg1: memref<8x256xf32, #tpu.memory_space<vmem>>, %arg2: memref<8x1xf32, #tpu.memory_space<vmem>>) attributes {dimension_semantics = [#tpu.dimension_semantics<parallel>], iteration_bounds = array<i64: 1>, scalar_prefetch = 0 : i64, scratch_operands = 0 : i64, tpu.core_type = #tpu.core_type<tc>, window_params = [{transform_indices = @transform_0, window_bounds = array<i64: 8, 256>}, {transform_indices = @transform_1, window_bounds = array<i64: 8, 1>}]} {
    %c0 = arith.constant 0 : index
    %c0_0 = arith.constant 0 : index
    %0 = vector.load %arg1[%c0, %c0_0] : memref<8x256xf32, #tpu.memory_space<vmem>>, vector<8x256xf32>
    %cst = arith.constant dense<0.000000e+00> : vector<8xf32>
    %1 = vector.multi_reduction <add>, %0, %cst [1] : vector<8x256xf32> to vector<8xf32>
    %2 = vector.shape_cast %1 : vector<8xf32> to vector<8x1xf32>
    %cst_1 = arith.constant 3.906250e-03 : f32
    %3 = vector.broadcast %cst_1 : f32 to vector<8x1xf32>
    %4 = arith.mulf %2, %3 : vector<8x1xf32>
    %c0_2 = arith.constant 0 : index
    %c0_3 = arith.constant 0 : index
    %5 = vector.load %arg2[%c0_2, %c0_3] : memref<8x1xf32, #tpu.memory_space<vmem>>, vector<8x1xf32>
    tpu.vector_store %arg2[%c0_2, %c0_3], %4 {strides = array<i32>} : memref<8x1xf32, #tpu.memory_space<vmem>>, vector<8x1xf32>,
    return
  }
  func.func @transform_0(%arg0: i32) -> (i32, i32) {
    %c0_i32 = arith.constant 0 : i32
    %c0_i32_0 = arith.constant 0 : i32
    return %arg0, %c0_i32 : i32, i32
  }
  func.func @transform_1(%arg0: i32) -> (i32, i32) {
    %c0_i32 = arith.constant 0 : i32
    %c0_i32_0 = arith.constant 0 : i32
    return %arg0, %c0_i32 : i32, i32
  }
}

</mosaic_0001>

<llo_original>
// kernel: tpu_custom_call.1
$region0: #{tpu_custom_call.1}
  #allocation0 [shape = 'u32[]', space=smem, size = 0x4, offset = 0x4, fixed_abs, tag = 'smem constant byte address 0x4 - core index']
  #allocation1 [shape = 'u32[72,128]{1,0:T(1,128)}', space=vmem, size = 0x9000, scoped, tag = 'internal scratch']
  %s0 = inlined_call_operand.hbm [shape: f32[8,256], index: 0, kind: input, shape index: {}]
  %s1 = inlined_call_operand.vmem [shape: f32[8,1], index: 1, kind: output, shape index: {}]
  %s2 = sld [smem:[#allocation0]]
  $region18: #{tpu_custom_call.1} parent=0
    _
  %s4 = ssub.s32 1, %s2
  %s5 = scalar_select 0, %s4, %s2
  $region1: #{tpu_custom_call.1} parent=0
    #allocation2 [shape = 'u8[8192]{0}', space=vmem, size = 0x2000, scoped, tag = 'input window, operand 0, single buffered']
    #allocation3 [shape = 's32[1]{0}', space=sflag, size = 0x4, scoped, tag = 'scoped memory for tpu_custom_call.1']
    %6 = vsyncpa [#allocation3], 0
    // Predicated region
    $region2: #{tpu_custom_call.1} parent=1 // pred_check
      _
    $region3: #{tpu_custom_call.1} parent=1 // pred_check_branch
      %8 = sbr.rel (0) target = $region5
    $region4: #{tpu_custom_call.1} parent=1 // pred_region
      %10 = vsyncadd [#allocation3], 0
      %s12 = sshll.u32 %s0, 4
      %s13 = int_to_ptr.hbm [resolvable:$true] %s12
      %s14 = sshll.u32 [#allocation2], 4
      %s15 = int_to_ptr.vmem [resolvable:$true] %s14
      %17 = dma.hbm_to_vmem [thread:$0]  %s13, 256, %s15, [#allocation3]
    $region5: #{tpu_custom_call.1} parent=1 // pred_fallthru
      _
    // Predicated region
    $region6: #{tpu_custom_call.1} parent=1 // pred_check
      _
    $region7: #{tpu_custom_call.1} parent=1 // pred_check_branch
      %19 = sbr.rel (0) target = $region9
    $region8: #{tpu_custom_call.1} parent=1 // pred_region
      %21 = dma.done [#allocation3], 256
    $region9: #{tpu_custom_call.1} parent=1 // pred_fallthru
      _
    %v22 = vld [vmem:[#allocation2] sm:$0xff]
    %v23 = vld [vmem:[#allocation2 + $0x8] sm:$0xff]
    %v24 = vadd.f32 %v22, %v23
    %25 = vadd.xlane.f32.xlu0 %v24
    %v26 = vpop.xlane.xlu0 %25
    %v27 = vmul.f32 %v26, 0.00390625
    %vm28 = vcmask 7168
    %29 = vst.msk [vmem:[%s1] sm:$0xff] %vm28, %v27
    // Predicated region
    $region10: #{tpu_custom_call.1} parent=1 // pred_check
      _
    $region11: #{tpu_custom_call.1} parent=1 // pred_check_branch
      %31 = sbr.rel (0) target = $region13
    $region12: #{tpu_custom_call.1} parent=1 // pred_region
      _
    $region13: #{tpu_custom_call.1} parent=1 // pred_fallthru
      _
    // Predicated region
    $region14: #{tpu_custom_call.1} parent=1 // pred_check
      _
    $region15: #{tpu_custom_call.1} parent=1 // pred_check_branch
      %33 = sbr.rel (0) target = $region17
    $region16: #{tpu_custom_call.1} parent=1 // pred_region
      _
    $region17: #{tpu_custom_call.1} parent=1 // pred_fallthru
      _
    %34 = vsyncpa [#allocation3], 1

</llo_original>
